<compile_context>
chip_gen: v7x
topology: tpu7x:2x2x1
jax: 0.10.0
libtpu: 0.0.40
codegen_flags: <defaults>
</compile_context>

<pallas_src>
import functools

import jax
import jax.numpy as jnp
from jax.experimental import pallas as pl
from jax.experimental.pallas import tpu as pltpu


def _round_up(x, m):
    return -(-x // m) * m


# ----------------------------------------------------------------------------
# Pallas kernel: fused scoring epilogue
#   o[b, e] = sum_d x[b, d] * ent_t[d, e]  +  xmis[b]  +  bias[e]
# ----------------------------------------------------------------------------
def _score_kernel(x_ref, ent_t_ref, xmis_ref, b_ref, o_ref):
    # x_ref     : (Bp, D)   bf16  resident query block
    # ent_t_ref : (D,  TN)  bf16  tile of the pre-transposed entity table
    # xmis_ref  : (Bp, 1)   f32   resident per-row x . mis_pos correction
    # b_ref     : (1,  TN)  f32   per-entity bias tile
    # o_ref     : (Bp, TN)  f32   output score tile (lane-dense, TN % 128 == 0)
    s = jnp.dot(x_ref[...], ent_t_ref[...], preferred_element_type=jnp.float32)
    o_ref[...] = s + xmis_ref[...] + b_ref[...]


def _choose_tile(n_ent, emb_dim, bp_est=128, budget_bytes=12 << 20):
    """Pick the widest entity tile that keeps the double-buffered footprint
    under the smallest default scoped-VMEM limit (v5e: 16 MiB), so no
    vmem_limit_bytes override is needed on any chip (incl. v7x's 64 MiB)."""
    tn = 4096
    while tn > 256:
        foot = (2 * tn * emb_dim * 2        # double-buffered bf16 ent tile
                + 2 * bp_est * tn * 4       # double-buffered f32 output tile
                + bp_est * emb_dim * 2      # resident bf16 x
                + 2 * tn * 4)               # bias tile
        if foot <= budget_bytes:
            break
        tn //= 2
    n_pad_min = _round_up(n_ent, 128)
    if n_pad_min <= tn:                     # whole table fits one tile
        return n_pad_min, n_pad_min
    return tn, _round_up(n_ent, tn)


@functools.partial(jax.jit, static_argnames=("tn",))
def pallas_score(x_bf16, ent_t_bf16, xmis, bias_row, *, tn):
    """scores = x @ ent_t + xmis + bias   (f32 accumulation on the MXU)."""
    Bp, D = x_bf16.shape
    _, Np = ent_t_bf16.shape
    assert Np % tn == 0

    return pl.pallas_call(
        _score_kernel,
        out_shape=jax.ShapeDtypeStruct((Bp, Np), jnp.float32),
        grid_spec=pltpu.PrefetchScalarGridSpec(
            num_scalar_prefetch=0,
            grid=(Np // tn,),
            in_specs=[
                pl.BlockSpec((Bp, D), lambda j: (0, 0)),   # x (resident)
                pl.BlockSpec((D, tn), lambda j: (0, j)),   # ent_t tile (streamed)
                pl.BlockSpec((Bp, 1), lambda j: (0, 0)),   # x . mis_pos (resident)
                pl.BlockSpec((1, tn), lambda j: (0, j)),   # bias tile
            ],
            out_specs=pl.BlockSpec((Bp, tn), lambda j: (0, j)),
        ),
        # "parallel" lets v7x megacore shard the entity stream across both TCs;
        # it is a no-op on single-TC v5e/v6e.
        compiler_params=pltpu.CompilerParams(
            dimension_semantics=("parallel",),
        ),
    )(x_bf16, ent_t_bf16, xmis, bias_row)


# ----------------------------------------------------------------------------
# Parameter construction (deterministic xavier-uniform, mirrors HMTE.__init__)
# ----------------------------------------------------------------------------
def _xavier_uniform(key, shape, dtype=jnp.float32):
    fan_in = shape[-1]
    fan_out = shape[-2] if len(shape) > 1 else shape[-1]
    bound = (6.0 / (fan_in + fan_out)) ** 0.5
    return jax.random.uniform(key, shape, dtype, minval=-bound, maxval=bound)


class HMTEPallas:
    def __init__(self, n_ent, n_rel, emb_dim, max_arity, key):
        self.n_ent = n_ent
        self.n_rel = n_rel
        self.emb_dim = emb_dim
        self.max_arity = max_arity
        ks = jax.random.split(key, 8)
        self.ent_embeddings = _xavier_uniform(ks[0], (n_ent, emb_dim))
        self.rel_embeddings = _xavier_uniform(ks[1], (n_rel, emb_dim))
        self.pos_embeddings = _xavier_uniform(ks[2], (max_arity, emb_dim))
        self.propmt = _xavier_uniform(ks[3], (1, emb_dim))
        self.edge_query_embedding = _xavier_uniform(ks[4], (max_arity, 64))
        self.edge_key_embedding = _xavier_uniform(ks[5], (max_arity, 64))
        self.edge_value_embedding = _xavier_uniform(ks[6], (max_arity, 64))
        self.b = jnp.zeros((n_ent,), jnp.float32)

        # One-time scoring-table precompute (inference-style; recompute if the
        # entity table / bias are ever updated):
        #   - transpose to (D, N)  -> no XLU transpose in the kernel
        #   - bf16                  -> halves HBM table traffic, native MXU input
        #   - pad N to a tile multiple (padded cols are zero, sliced off later)
        self.tn, self.n_pad = _choose_tile(n_ent, emb_dim)
        ent_t = jnp.zeros((emb_dim, self.n_pad), jnp.bfloat16)
        self.ent_t_bf16 = ent_t.at[:, :n_ent].set(
            self.ent_embeddings.T.astype(jnp.bfloat16))
        bias_row = jnp.zeros((1, self.n_pad), jnp.float32)
        self.bias_row = bias_row.at[:, :n_ent].set(self.b[None, :])

    def forward(self, rel_idx, ent_idx, miss_ent_domain):
        # --- embedding gathers / positional shift (plain-JAX glue) ----------
        r = self.rel_embeddings[rel_idx][:, None, :]            # (B, 1, D)
        ents = self.ent_embeddings[ent_idx]                     # (B, A, D)
        arity = ent_idx.shape[1]
        pos_list = [i for i in range(arity + 1) if i + 1 != miss_ent_domain]
        pos = jnp.asarray(pos_list, dtype=jnp.int32)
        pos = jnp.broadcast_to(pos[None, :], ent_idx.shape)     # (B, A)
        ents = ents + self.pos_embeddings[pos]                  # (B, A, D)
        concat_input = jnp.concatenate([r, ents], axis=1)       # (B, A+1, D)

        # edge positional q/k/v (only consumed by the untranslated decoder)
        pos_query = self.edge_query_embedding[pos]              # (B, A, 64)
        pos_key = self.edge_key_embedding[pos]                  # (B, A, 64)
        pos_value = self.edge_value_embedding[pos]              # (B, A, 64)
        del pos_query, pos_key, pos_value

        # TODO(synk): Mamba2 preprocess (Mamba_Layer/Mamba2) and the Hmte_Model
        # decoder stack are not defined in the provided source; stand-in keeps
        # the [:, -1, :] token selection that feeds the scoring kernel.
        x = concat_input[:, -1, :]                              # (B, D) f32

        # --- fused Pallas scoring ------------------------------------------
        B, D = x.shape
        mis_pos = self.pos_embeddings[miss_ent_domain - 1]      # (D,)
        # algebraic split: x @ (E + mis)^T == x @ E^T + (x . mis)[:, None]
        xmis = (x @ mis_pos).reshape(B, 1).astype(jnp.float32)  # (B, 1)

        # pad batch rows up to the f32 sublane multiple (>= 8) so the output
        # tile is not a masked partial store; padded rows are sliced off.
        Bp = max(8, _round_up(B, 8))
        x_pad = jnp.zeros((Bp, D), jnp.bfloat16).at[:B].set(x.astype(jnp.bfloat16))
        xmis_pad = jnp.zeros((Bp, 1), jnp.float32).at[:B].set(xmis)

        scores_pad = pallas_score(x_pad, self.ent_t_bf16, xmis_pad,
                                  self.bias_row, tn=self.tn)    # (Bp, N_pad)
        scores = scores_pad[:B, :self.n_ent]                    # (B, n_ent)
        return scores, 0


# ----------------------------------------------------------------------------
if __name__ == "__main__":
    key = jax.random.PRNGKey(0)
    pk, rk, ek = jax.random.split(key, 3)

    # small, shape-consistent config
    n_ent, n_rel, emb_dim, max_arity = 512, 8, 128, 6
    batch, arity, miss_ent_domain = 2, 3, 2

    model = HMTEPallas(n_ent, n_rel, emb_dim, max_arity, pk)

    rel_idx = jax.random.randint(rk, (batch,), 0, n_rel)
    ent_idx = jax.random.randint(ek, (batch, arity), 0, n_ent)

    scores, reg = model.forward(rel_idx, ent_idx, miss_ent_domain)
    scores = jax.block_until_ready(scores)
    assert scores.shape == (batch, n_ent) and scores.dtype == jnp.float32

    # plain-JAX reference of the scoring math (f32), loose tol for bf16 table
    r = model.rel_embeddings[rel_idx][:, None, :]
    ents = model.ent_embeddings[ent_idx]
    pos = jnp.asarray([i for i in range(arity + 1) if i + 1 != miss_ent_domain],
                      dtype=jnp.int32)
    pos = jnp.broadcast_to(pos[None, :], ent_idx.shape)
    ents = ents + model.pos_embeddings[pos]
    x_ref = jnp.concatenate([r, ents], axis=1)[:, -1, :]
    tar = model.ent_embeddings + model.pos_embeddings[miss_ent_domain - 1][None, :]
    ref = x_ref @ tar.T + model.b[None, :]
    assert float(jnp.max(jnp.abs(scores - ref))) < 1e-2

    print("KERNEL_OK")
</pallas_src>

<mosaic_0001>
module attributes {stable_mosaic.version = 11 : i64} {
  func.func @_score_kernel(%arg0: i32, %arg1: memref<8x128xbf16, #tpu.memory_space<vmem>>, %arg2: memref<128x512xbf16, #tpu.memory_space<vmem>>, %arg3: memref<8x1xf32, #tpu.memory_space<vmem>>, %arg4: memref<1x512xf32, #tpu.memory_space<vmem>>, %arg5: memref<8x512xf32, #tpu.memory_space<vmem>>) attributes {dimension_semantics = [#tpu.dimension_semantics<parallel>], iteration_bounds = array<i64: 1>, scalar_prefetch = 0 : i64, scratch_operands = 0 : i64, tpu.core_type = #tpu.core_type<tc>, window_params = [{pipeline_mode = #tpu.pipeline_mode<synchronous>, transform_indices = @transform_0, window_bounds = array<i64: 8, 128>}, {transform_indices = @transform_1, window_bounds = array<i64: 128, 512>}, {pipeline_mode = #tpu.pipeline_mode<synchronous>, transform_indices = @transform_2, window_bounds = array<i64: 8, 1>}, {transform_indices = @transform_3, window_bounds = array<i64: 1, 512>}, {transform_indices = @transform_4, window_bounds = array<i64: 8, 512>}]} {
    %c0 = arith.constant 0 : index
    %c0_0 = arith.constant 0 : index
    %0 = vector.load %arg1[%c0, %c0_0] : memref<8x128xbf16, #tpu.memory_space<vmem>>, vector<8x128xbf16>
    %c0_1 = arith.constant 0 : index
    %c0_2 = arith.constant 0 : index
    %1 = vector.load %arg2[%c0_1, %c0_2] : memref<128x512xbf16, #tpu.memory_space<vmem>>, vector<128x512xbf16>
    %cst = arith.constant dense<0.000000e+00> : vector<8x512xf32>
    %2 = tpu.matmul %0, %1, %cst {dimension_numbers = #tpu.dot_dimension_numbers<[1], [0], [0], [1], [0, 0, 1, 1], [], []>} : vector<8x128xbf16>, vector<128x512xbf16>, vector<8x512xf32> -> vector<8x512xf32>
    %c0_3 = arith.constant 0 : index
    %c0_4 = arith.constant 0 : index
    %3 = vector.load %arg3[%c0_3, %c0_4] : memref<8x1xf32, #tpu.memory_space<vmem>>, vector<8x1xf32>
    %4 = vector.broadcast %3 : vector<8x1xf32> to vector<8x512xf32>
    %5 = arith.addf %2, %4 : vector<8x512xf32>
    %c0_5 = arith.constant 0 : index
    %c0_6 = arith.constant 0 : index
    %6 = vector.load %arg4[%c0_5, %c0_6] : memref<1x512xf32, #tpu.memory_space<vmem>>, vector<1x512xf32>
    %7 = vector.broadcast %6 : vector<1x512xf32> to vector<8x512xf32>
    %8 = arith.addf %5, %7 : vector<8x512xf32>
    %c0_7 = arith.constant 0 : index
    %c0_8 = arith.constant 0 : index
    %9 = vector.load %arg5[%c0_7, %c0_8] : memref<8x512xf32, #tpu.memory_space<vmem>>, vector<8x512xf32>
    tpu.vector_store %arg5[%c0_7, %c0_8], %8 {strides = array<i32>} : memref<8x512xf32, #tpu.memory_space<vmem>>, vector<8x512xf32>,
    return
  }
  func.func @transform_0(%arg0: i32) -> (i32, i32) {
    %c0_i32 = arith.constant 0 : i32
    %c0_i32_0 = arith.constant 0 : i32
    %c0_i32_1 = arith.constant 0 : i32
    return %c0_i32, %c0_i32_0 : i32, i32
  }
  func.func @transform_1(%arg0: i32) -> (i32, i32) {
    %c0_i32 = arith.constant 0 : i32
    %c0_i32_0 = arith.constant 0 : i32
    return %c0_i32, %arg0 : i32, i32
  }
  func.func @transform_2(%arg0: i32) -> (i32, i32) {
    %c0_i32 = arith.constant 0 : i32
    %c0_i32_0 = arith.constant 0 : i32
    %c0_i32_1 = arith.constant 0 : i32
    return %c0_i32, %c0_i32_0 : i32, i32
  }
  func.func @transform_3(%arg0: i32) -> (i32, i32) {
    %c0_i32 = arith.constant 0 : i32
    %c0_i32_0 = arith.constant 0 : i32
    return %c0_i32, %arg0 : i32, i32
  }
  func.func @transform_4(%arg0: i32) -> (i32, i32) {
    %c0_i32 = arith.constant 0 : i32
    %c0_i32_0 = arith.constant 0 : i32
    return %c0_i32, %arg0 : i32, i32
  }
}

</mosaic_0001>

<llo_original>
// kernel: pallas_score.1
$region0: #{pallas_score.1}
  #allocation0 [shape = 'u32[]', space=smem, size = 0x4, offset = 0x4, fixed_abs, tag = 'smem constant byte address 0x4 - core index']
  #allocation1 [shape = 'u32[144,128]{1,0:T(1,128)}', space=vmem, size = 0x12000, scoped, tag = 'internal scratch']
  %s0 = inlined_call_operand.vmem [shape: bf16[8,128], index: 0, kind: input, shape index: {}]
  %s1 = inlined_call_operand.hbm [shape: bf16[128,512], index: 1, kind: input, shape index: {}]
  %s2 = inlined_call_operand.vmem [shape: f32[8,1], index: 2, kind: input, shape index: {}]
  %s3 = inlined_call_operand.vmem [shape: f32[1,512], index: 3, kind: input, shape index: {}]
  %s4 = inlined_call_operand.hbm [shape: f32[8,512], index: 4, kind: output, shape index: {}]
  %s5 = sld [smem:[#allocation0]]
  $region30: #{pallas_score.1} parent=0
    _
  %s7 = ssub.s32 1, %s5
  %s8 = scalar_select 0, %s7, %s5
  $region1: #{pallas_score.1} parent=0
    #allocation2 [shape = 'u8[131072]{0}', space=vmem, size = 0x20000, scoped, tag = 'input window, operand 1, single buffered']
    #allocation3 [shape = 's32[1]{0}', space=sflag, size = 0x4, scoped, tag = 'scoped memory for pallas_score.1']
    #allocation4 [shape = 's32[1]{0}', space=sflag, size = 0x4, scoped, tag = 'scoped memory for pallas_score.1']
    #allocation5 [shape = 'u8[16384]{0}', space=vmem, size = 0x4000, scoped, tag = 'output window, operand 0, single buffered']
    %9 = vsyncpa [#allocation3], 0
    %10 = vsyncpa [#allocation4], 0
    // Predicated region
    $region2: #{pallas_score.1} parent=1 // pred_check
      _
    $region3: #{pallas_score.1} parent=1 // pred_check_branch
      %12 = sbr.rel (0) target = $region5
    $region4: #{pallas_score.1} parent=1 // pred_region
      _
    $region5: #{pallas_score.1} parent=1 // pred_fallthru
      _
    // Predicated region
    $region6: #{pallas_score.1} parent=1 // pred_check
      _
    $region7: #{pallas_score.1} parent=1 // pred_check_branch
      %14 = sbr.rel (0) target = $region9
    $region8: #{pallas_score.1} parent=1 // pred_region
      %s16 = ssub.s32 4096, 4096
      %17 = vsyncadd [#allocation3], %s16
      %s18 = sshll.u32 [#allocation2], 4
      %s19 = int_to_ptr.vmem [resolvable:$true] %s18
      %24 = dma.hbm_to_vmem [thread:$0]  %s1, 4096, %s19, [#allocation3], 256, 256, 16
    $region9: #{pallas_score.1} parent=1 // pred_fallthru
      _
    // Predicated region
    $region10: #{pallas_score.1} parent=1 // pred_check
      _
    $region11: #{pallas_score.1} parent=1 // pred_check_branch
      %26 = sbr.rel (0) target = $region13
    $region12: #{pallas_score.1} parent=1 // pred_region
      _
    $region13: #{pallas_score.1} parent=1 // pred_fallthru
      _
    // Predicated region
    $region14: #{pallas_score.1} parent=1 // pred_check
      _
    $region15: #{pallas_score.1} parent=1 // pred_check_branch
      %28 = sbr.rel (0) target = $region17
    $region16: #{pallas_score.1} parent=1 // pred_region
      _
    $region17: #{pallas_score.1} parent=1 // pred_fallthru
      _
    // Predicated region
    $region18: #{pallas_score.1} parent=1 // pred_check
      _
    $region19: #{pallas_score.1} parent=1 // pred_check_branch
      %30 = sbr.rel (0) target = $region21
    $region20: #{pallas_score.1} parent=1 // pred_region
      %31 = dma.done [#allocation3], 4096
    $region21: #{pallas_score.1} parent=1 // pred_fallthru
      _
    %v33 = vld [vmem:[%s0] sm:$0xf]
    %v34 = vld [vmem:[#allocation2] sm:$0xff]
    %v35 = vld [vmem:[#allocation2 + $0x8] sm:$0xff]
    %v36 = vld [vmem:[#allocation2 + $0x10] sm:$0xff]
    %v37 = vld [vmem:[#allocation2 + $0x18] sm:$0xff]
    %v38 = vld [vmem:[#allocation2 + $0x20] sm:$0xff]
    %v39 = vld [vmem:[#allocation2 + $0x28] sm:$0xff]
    %v40 = vld [vmem:[#allocation2 + $0x30] sm:$0xff]
    %v41 = vld [vmem:[#allocation2 + $0x38] sm:$0xff]
    %v42 = vld [vmem:[#allocation2 + $0x40] sm:$0xff]
    %v43 = vld [vmem:[#allocation2 + $0x48] sm:$0xff]
    %v44 = vld [vmem:[#allocation2 + $0x50] sm:$0xff]
    %v45 = vld [vmem:[#allocation2 + $0x58] sm:$0xff]
    %v46 = vld [vmem:[#allocation2 + $0x60] sm:$0xff]
    %v47 = vld [vmem:[#allocation2 + $0x68] sm:$0xff]
    %v48 = vld [vmem:[#allocation2 + $0x70] sm:$0xff]
    %v49 = vld [vmem:[#allocation2 + $0x78] sm:$0xff]
    %v50 = vld [vmem:[#allocation2 + $0x80] sm:$0xff]
    %v51 = vld [vmem:[#allocation2 + $0x88] sm:$0xff]
    %v52 = vld [vmem:[#allocation2 + $0x90] sm:$0xff]
    %v53 = vld [vmem:[#allocation2 + $0x98] sm:$0xff]
    %v54 = vld [vmem:[#allocation2 + $0xa0] sm:$0xff]
    %v55 = vld [vmem:[#allocation2 + $0xa8] sm:$0xff]
    %v56 = vld [vmem:[#allocation2 + $0xb0] sm:$0xff]
    %v57 = vld [vmem:[#allocation2 + $0xb8] sm:$0xff]
    %v58 = vld [vmem:[#allocation2 + $0xc0] sm:$0xff]
    %v59 = vld [vmem:[#allocation2 + $0xc8] sm:$0xff]
    %v60 = vld [vmem:[#allocation2 + $0xd0] sm:$0xff]
    %v61 = vld [vmem:[#allocation2 + $0xd8] sm:$0xff]
    %v62 = vld [vmem:[#allocation2 + $0xe0] sm:$0xff]
    %v63 = vld [vmem:[#allocation2 + $0xe8] sm:$0xff]
    %v64 = vld [vmem:[#allocation2 + $0xf0] sm:$0xff]
    %v65 = vld [vmem:[#allocation2 + $0xf8] sm:$0xff]
    %v66 = vld [vmem:[%s2] sm:$0xff]
    %68 = vset.pattern.permute.xlu0 0
    %69 = vperm.xlu0 %68, %v66
    %v70 = vpop.permute.xlu0 %69
    %v104 = vunpack.c.l.b16 %v34
    %v105 = vunpack.c.h.b16 %v34
    %v106 = vunpack.c.l.b16 %v35
    %v107 = vunpack.c.h.b16 %v35
    %v108 = vunpack.c.l.b16 %v36
    %v109 = vunpack.c.h.b16 %v36
    %v110 = vunpack.c.l.b16 %v37
    %v111 = vunpack.c.h.b16 %v37
    %v112 = vunpack.c.l.b16 %v38
    %v113 = vunpack.c.h.b16 %v38
    %v114 = vunpack.c.l.b16 %v39
    %v115 = vunpack.c.h.b16 %v39
    %v116 = vunpack.c.l.b16 %v40
    %v117 = vunpack.c.h.b16 %v40
    %v118 = vunpack.c.l.b16 %v41
    %v119 = vunpack.c.h.b16 %v41
    %v120 = vunpack.c.l.b16 %v42
    %v121 = vunpack.c.h.b16 %v42
    %v122 = vunpack.c.l.b16 %v43
    %v123 = vunpack.c.h.b16 %v43
    %v124 = vunpack.c.l.b16 %v44
    %v125 = vunpack.c.h.b16 %v44
    %v126 = vunpack.c.l.b16 %v45
    %v127 = vunpack.c.h.b16 %v45
    %v128 = vunpack.c.l.b16 %v46
    %v129 = vunpack.c.h.b16 %v46
    %v130 = vunpack.c.l.b16 %v47
    %v131 = vunpack.c.h.b16 %v47
    %v132 = vunpack.c.l.b16 %v48
    %v133 = vunpack.c.h.b16 %v48
    %v134 = vunpack.c.l.b16 %v49
    %v135 = vunpack.c.h.b16 %v49
    %v136 = vunpack.c.l.b16 %v50
    %v137 = vunpack.c.h.b16 %v50
    %v138 = vunpack.c.l.b16 %v51
    %v139 = vunpack.c.h.b16 %v51
    %v140 = vunpack.c.l.b16 %v52
    %v141 = vunpack.c.h.b16 %v52
    %v142 = vunpack.c.l.b16 %v53
    %v143 = vunpack.c.h.b16 %v53
    %v144 = vunpack.c.l.b16 %v54
    %v145 = vunpack.c.h.b16 %v54
    %v146 = vunpack.c.l.b16 %v55
    %v147 = vunpack.c.h.b16 %v55
    %v148 = vunpack.c.l.b16 %v56
    %v149 = vunpack.c.h.b16 %v56
    %v150 = vunpack.c.l.b16 %v57
    %v151 = vunpack.c.h.b16 %v57
    %v152 = vunpack.c.l.b16 %v58
    %v153 = vunpack.c.h.b16 %v58
    %v154 = vunpack.c.l.b16 %v59
    %v155 = vunpack.c.h.b16 %v59
    %v156 = vunpack.c.l.b16 %v60
    %v157 = vunpack.c.h.b16 %v60
    %v158 = vunpack.c.l.b16 %v61
    %v159 = vunpack.c.h.b16 %v61
    %v160 = vunpack.c.l.b16 %v62
    %v161 = vunpack.c.h.b16 %v62
    %v162 = vunpack.c.l.b16 %v63
    %v163 = vunpack.c.h.b16 %v63
    %v164 = vunpack.c.l.b16 %v64
    %v165 = vunpack.c.h.b16 %v64
    %v166 = vunpack.c.l.b16 %v65
    %v167 = vunpack.c.h.b16 %v65
    %v168 = vpack.c.b16 %v108, %v104
    %v169 = vpack.c.b16 %v109, %v105
    %v170 = vpack.c.b16 %v110, %v106
    %v171 = vpack.c.b16 %v111, %v107
    %v172 = vpack.c.b16 %v116, %v112
    %v173 = vpack.c.b16 %v117, %v113
    %v174 = vpack.c.b16 %v118, %v114
    %v175 = vpack.c.b16 %v119, %v115
    %v176 = vpack.c.b16 %v124, %v120
    %v177 = vpack.c.b16 %v125, %v121
    %v178 = vpack.c.b16 %v126, %v122
    %v179 = vpack.c.b16 %v127, %v123
    %v180 = vpack.c.b16 %v132, %v128
    %v181 = vpack.c.b16 %v133, %v129
    %v182 = vpack.c.b16 %v134, %v130
    %v183 = vpack.c.b16 %v135, %v131
    %v184 = vpack.c.b16 %v140, %v136
    %v185 = vpack.c.b16 %v141, %v137
    %v186 = vpack.c.b16 %v142, %v138
    %v187 = vpack.c.b16 %v143, %v139
    %v188 = vpack.c.b16 %v148, %v144
    %v189 = vpack.c.b16 %v149, %v145
    %v190 = vpack.c.b16 %v150, %v146
    %v191 = vpack.c.b16 %v151, %v147
    %v192 = vpack.c.b16 %v156, %v152
    %v193 = vpack.c.b16 %v157, %v153
    %v194 = vpack.c.b16 %v158, %v154
    %v195 = vpack.c.b16 %v159, %v155
    %v196 = vpack.c.b16 %v164, %v160
    %v197 = vpack.c.b16 %v165, %v161
    %v198 = vpack.c.b16 %v166, %v162
    %v199 = vpack.c.b16 %v167, %v163
    %232 = vmatprep.subr.bf16.mxu0 %v169
    %233 = vmatpush1.bf16.msra.mxu0 %v168
    %234 = vmatprep.subr.bf16.mxu0 %v173
    %235 = vmatpush1.bf16.msra.mxu0 %v172
    %236 = vmatprep.subr.bf16.mxu0 %v177
    %237 = vmatpush1.bf16.msra.mxu0 %v176
    %238 = vmatprep.subr.bf16.mxu0 %v181
    %239 = vmatpush1.bf16.msra.mxu0 %v180
    %240 = vmatprep.subr.bf16.mxu0 %v185
    %241 = vmatpush1.bf16.msra.mxu0 %v184
    %242 = vmatprep.subr.bf16.mxu0 %v189
    %243 = vmatpush1.bf16.msra.mxu0 %v188
    %244 = vmatprep.subr.bf16.mxu0 %v193
    %245 = vmatpush1.bf16.msra.mxu0 %v192
    %246 = vmatprep.subr.bf16.mxu0 %v197
    %247 = vmatpush1.bf16.msra.mxu0 %v196
    %248 = vmatprep.subr.bf16.mxu0 0
    %249 = vmatpush1.bf16.msra.mxu0 0
    %250 = vmatprep.subr.bf16.mxu0 0
    %251 = vmatpush1.bf16.msra.mxu0 0
    %252 = vmatprep.subr.bf16.mxu0 0
    %253 = vmatpush1.bf16.msra.mxu0 0
    %254 = vmatprep.subr.bf16.mxu0 0
    %255 = vmatpush1.bf16.msra.mxu0 0
    %256 = vmatprep.subr.bf16.mxu0 0
    %257 = vmatpush1.bf16.msra.mxu0 0
    %258 = vmatprep.subr.bf16.mxu0 0
    %259 = vmatpush1.bf16.msra.mxu0 0
    %260 = vmatprep.subr.bf16.mxu0 0
    %261 = vmatpush1.bf16.msra.mxu0 0
    %262 = vmatprep.subr.bf16.mxu0 0
    %263 = vmatpush1.bf16.msra.mxu0 0
    %264 = vmatprep.mubr.bf16.mxu0 0
    %265 = vmatmul.mubr.bf16.gmra.mrb[0].mxu0 %v33
    %v266 = vpop.f32.mrb[0].mxu0
    %v267 = vadd.f32 %v70, %v266
    %v268 = vpop.f32.mrb[0].mxu0
    %v269 = vadd.f32 %v70, %v268
    %v270 = vpop.f32.mrb[0].mxu0
    %v271 = vpop.f32.mrb[0].mxu0
    %272 = vdwg.mxu0
    %273 = vmatprep.subr.bf16.mxu0 %v171
    %274 = vmatpush1.bf16.msra.mxu0 %v170
    %275 = vmatprep.subr.bf16.mxu0 %v175
    %276 = vmatpush1.bf16.msra.mxu0 %v174
    %277 = vmatprep.subr.bf16.mxu0 %v179
    %278 = vmatpush1.bf16.msra.mxu0 %v178
    %279 = vmatprep.subr.bf16.mxu0 %v183
    %280 = vmatpush1.bf16.msra.mxu0 %v182
    %281 = vmatprep.subr.bf16.mxu0 %v187
    %282 = vmatpush1.bf16.msra.mxu0 %v186
    %283 = vmatprep.subr.bf16.mxu0 %v191
    %284 = vmatpush1.bf16.msra.mxu0 %v190
    %285 = vmatprep.subr.bf16.mxu0 %v195
    %286 = vmatpush1.bf16.msra.mxu0 %v194
    %287 = vmatprep.subr.bf16.mxu0 %v199
    %288 = vmatpush1.bf16.msra.mxu0 %v198
    %289 = vmatprep.subr.bf16.mxu0 0
    %290 = vmatpush1.bf16.msra.mxu0 0
    %291 = vmatprep.subr.bf16.mxu0 0
    %292 = vmatpush1.bf16.msra.mxu0 0
    %293 = vmatprep.subr.bf16.mxu0 0
    %294 = vmatpush1.bf16.msra.mxu0 0
    %295 = vmatprep.subr.bf16.mxu0 0
    %296 = vmatpush1.bf16.msra.mxu0 0
    %297 = vmatprep.subr.bf16.mxu0 0
    %298 = vmatpush1.bf16.msra.mxu0 0
    %299 = vmatprep.subr.bf16.mxu0 0
    %300 = vmatpush1.bf16.msra.mxu0 0
    %301 = vmatprep.subr.bf16.mxu0 0
    %302 = vmatpush1.bf16.msra.mxu0 0
    %303 = vmatprep.subr.bf16.mxu0 0
    %304 = vmatpush1.bf16.msra.mxu0 0
    %305 = vmatprep.mubr.bf16.mxu0 0
    %306 = vmatmul.mubr.bf16.gmra.mrb[0].mxu0 %v33
    %v307 = vpop.f32.mrb[0].mxu0
    %v308 = vadd.f32 %v70, %v307
    %v309 = vpop.f32.mrb[0].mxu0
    %v310 = vadd.f32 %v70, %v309
    %v311 = vpop.f32.mrb[0].mxu0
    %v312 = vpop.f32.mrb[0].mxu0
    %313 = vdwg.mxu0
    %v314 = vld [vmem:[%s3] sm:$0xf]
    %v316 = vlaneseq
    %v317 = vshrl.u32 %v316, 7
    %v318 = vsub.s32 0, %v317
    %v319 = vrot.slane %v314, %v318
    %v320 = vlaneseq
    %v321 = vshrl.u32 %v320, 7
    %v322 = vsub.s32 1, %v321
    %v323 = vrot.slane %v314, %v322
    %v324 = vlaneseq
    %v325 = vshrl.u32 %v324, 7
    %v326 = vsub.s32 2, %v325
    %v327 = vrot.slane %v314, %v326
    %v328 = vlaneseq
    %v329 = vshrl.u32 %v328, 7
    %v330 = vsub.s32 3, %v329
    %v331 = vrot.slane %v314, %v330
    %v336 = vadd.f32 %v267, %v319
    %v337 = vadd.f32 %v269, %v323
    %v338 = vadd.f32 %v308, %v327
    %v339 = vadd.f32 %v310, %v331
    %340 = vst [vmem:[#allocation5] sm:$0xff] %v336
    %341 = vst [vmem:[#allocation5 + $0x8] sm:$0xff] %v337
    %342 = vst [vmem:[#allocation5 + $0x10] sm:$0xff] %v338
    %343 = vst [vmem:[#allocation5 + $0x18] sm:$0xff] %v339
    // Predicated region
    $region22: #{pallas_score.1} parent=1 // pred_check
      _
    $region23: #{pallas_score.1} parent=1 // pred_check_branch
      %345 = sbr.rel (0) target = $region25
    $region24: #{pallas_score.1} parent=1 // pred_region
      %s347 = ssub.s32 512, 512
      %348 = vsyncadd [#allocation4], %s347
      %s350 = sshll.u32 [#allocation5], 4
      %s351 = int_to_ptr.vmem [resolvable:$true] %s350
      %353 = dma.vmem_to_hbm [thread:$0]  %s351, 512, %s4, [#allocation4]
    $region25: #{pallas_score.1} parent=1 // pred_fallthru
      _
    // Predicated region
    $region26: #{pallas_score.1} parent=1 // pred_check
      _
    $region27: #{pallas_score.1} parent=1 // pred_check_branch
      %355 = sbr.rel (0) target = $region29
    $region28: #{pallas_score.1} parent=1 // pred_region
      %356 = dma.done [#allocation4], 512
    $region29: #{pallas_score.1} parent=1 // pred_fallthru
      _
    %357 = vsyncpa [#allocation3], 1
    %358 = vsyncpa [#allocation4], 1

</llo_original>
